<compile_context>
chip_gen: v7x
topology: tpu7x:2x2x1
jax: 0.10.0
libtpu: 0.0.40
codegen_flags: <defaults>
</compile_context>

<pallas_src>
import functools

import jax
import jax.numpy as jnp
from jax import lax
from jax.experimental import pallas as pl
from jax.experimental.pallas import tpu as pltpu


# ----------------------------------------------------------------------------
# generation-aware VMEM budgeting
# ----------------------------------------------------------------------------
@functools.lru_cache(maxsize=None)
def _vmem_limit_bytes():
    """Scoped-VMEM limit for this chip generation (~75% of physical VMEM).

    v5e/v6e: 128 MiB physical -> 96 MiB scoped; v7x: 64 MiB -> 48 MiB.
    Falls back to a conservative 48 MiB if the hardware query is unavailable.
    """
    try:
        info = pltpu.get_tpu_info()
        phys = int(getattr(info, "vmem_capacity_bytes", 0))
        if phys <= 0:
            raise ValueError("no vmem capacity reported")
    except Exception:
        phys = 64 * 1024 * 1024
    return (phys * 3) // 4


# ----------------------------------------------------------------------------
# tile-size helpers
# ----------------------------------------------------------------------------
def _pick_hw_chunk(hw, c, itemsize, budget_bytes, nbuf=2):
    """Largest multiple-of-128 divisor of hw such that nbuf (double-buffer)
    slabs of (C, chunk) fit in the per-input budget.  Full dim fallback."""
    if hw % 128 != 0:
        return hw
    best = 128
    cand = 128
    while cand <= hw:
        if hw % cand == 0 and nbuf * c * cand * itemsize <= budget_bytes:
            best = cand
        cand += 128
    return best


def _largest_divisor_tile(dim, base, cap):
    """Largest multiple of `base` dividing `dim`, capped at `cap`; full dim fallback."""
    if dim % base != 0:
        return dim
    best = base
    cand = base
    while cand <= min(dim, cap):
        if dim % cand == 0:
            best = cand
        cand += base
    return best


def _pick_apply_tiles(rows, cols, itemsize, block_budget):
    """(tr, tc) tiles for the mask-apply pass: lane-dense columns, sublane rows,
    one block <= block_budget bytes (input + output double buffers ~ 4x that)."""
    if cols % 128 == 0:
        tc_cap = max(128, (block_budget // (8 * itemsize)) // 128 * 128)
        tc = _largest_divisor_tile(cols, 128, min(8192, tc_cap))
    else:
        # full-extent (possibly lane-misaligned) fallback; rows tile still
        # keeps the block within budget for any realistic feature-map size.
        tc = cols
    tr_cap = max(8, min(1024, block_budget // max(1, tc * itemsize)))
    tr = _largest_divisor_tile(rows, 8, tr_cap)
    return tr, tc


# ----------------------------------------------------------------------------
# Kernel 1: ortho_channel rank + softmax over channels
#   vec   = x.reshape(N, C, H*W);  vec /= (||vec||_2 + 1e-8)
#   P     = |vec @ vec^T - I|
#   rank  = sum(P, -1) / C
#   x_max = softmax(rank, -1)
# Pipelined reduction over HW chunks accumulating the raw Gram matrix;
# normalization folded in at finalize via the Gram diagonal.
# ----------------------------------------------------------------------------
def _rank_softmax_kernel(v_ref, out_ref, acc_ref, *, cast_bf16):
    k = pl.program_id(1)
    num_k = pl.num_programs(1)
    C = acc_ref.shape[0]

    @pl.when(k == 0)
    def _init():
        acc_ref[...] = jnp.zeros_like(acc_ref)

    # (C, hw_chunk) slab.  bf16 operands keep the MXU on its fast path (notably
    # on v5e); accumulation stays f32.  NOTE: verify in the Mosaic dump that the
    # (((1,),(1,))) contraction does not emit a per-step XLU transpose of the
    # slab; if it does, feed a channels-last slab instead.
    v = v_ref[0]
    if cast_bf16:
        v = v.astype(jnp.bfloat16)
    acc_ref[...] += lax.dot_general(
        v, v, (((1,), (1,)), ((), ())),
        preferred_element_type=jnp.float32)

    @pl.when(k == num_k - 1)
    def _finalize():
        g = acc_ref[...]                                         # raw Gram (C, C), f32
        row = lax.broadcasted_iota(jnp.int32, (C, C), 0)
        col = lax.broadcasted_iota(jnp.int32, (C, C), 1)
        eye = (row == col).astype(jnp.float32)
        # sum-of-squares per channel = Gram diagonal; extract as a column and
        # a row vector from one masked product (no in-kernel transpose).
        ss = g * eye
        inv_c = 1.0 / (jnp.sqrt(jnp.sum(ss, axis=-1, keepdims=True)) + 1e-8)   # (C, 1)
        inv_r = 1.0 / (jnp.sqrt(jnp.sum(ss, axis=0, keepdims=True)) + 1e-8)    # (1, C)
        p = jnp.abs(g * inv_c * inv_r - eye)
        # p is symmetric -> sum over axis 0 == sum over axis -1 (ref semantics)
        rank = jnp.sum(p, axis=0, keepdims=True) / C             # (1, C)
        m = jnp.max(rank)
        e = jnp.exp(rank - m)
        sm = e / jnp.sum(e)                                      # (1, C)
        out_ref[0] = sm.astype(out_ref.dtype)


def ortho_channel_softmax(x, gram_bf16=True):
    """x: (N, C, H, W) -> softmax'd channel-orthogonality scores (N, C)."""
    N, C, H, W = x.shape
    HW = H * W
    itemsize = int(jnp.dtype(x.dtype).itemsize)
    limit = _vmem_limit_bytes()

    v = x.reshape(N, C, HW)
    pad = (-HW) % 128
    if pad:
        # Zero-pad the spatial axis to a lane multiple: zeros contribute
        # nothing to the Gram, chunks stay unmasked and VMEM-bounded.
        v = jnp.pad(v, ((0, 0), (0, 0), (0, pad)))
    HWp = HW + pad

    hw_chunk = _pick_hw_chunk(HWp, C, itemsize, budget_bytes=limit // 4)
    num_k = HWp // hw_chunk
    cast_bf16 = bool(gram_bf16) and v.dtype == jnp.float32
    kernel = functools.partial(_rank_softmax_kernel, cast_bf16=cast_bf16)

    out = pl.pallas_call(
        kernel,
        out_shape=jax.ShapeDtypeStruct((N, 1, C), jnp.float32),
        grid=(N, num_k),
        in_specs=[pl.BlockSpec((1, C, hw_chunk), lambda n, k: (n, 0, k))],
        out_specs=pl.BlockSpec((1, 1, C), lambda n, k: (n, 0, 0)),
        scratch_shapes=[pltpu.VMEM((C, C), jnp.float32)],
        compiler_params=pltpu.CompilerParams(
            dimension_semantics=("parallel", "arbitrary"),
            vmem_limit_bytes=limit),
        cost_estimate=pl.CostEstimate(
            flops=2 * N * C * C * HWp,
            transcendentals=N * C,
            bytes_accessed=N * C * HWp * itemsize + N * C * 4),
    )(v)
    return out.reshape(N, C)


# ----------------------------------------------------------------------------
# Kernel 2: apply per-channel multiplier (block_mask * rescale) to x
#   out[n, c, :, :] = x[n, c, :, :] * mult[n, c]
# Lane-dense tiling over x viewed as (N*C, H*W).
# ----------------------------------------------------------------------------
def _apply_mask_kernel(m_ref, x_ref, o_ref):
    # m_ref: (TR, 1) f32, x_ref: (TR, TC); multiply in f32, cast the product.
    o_ref[...] = (x_ref[...] * m_ref[...]).astype(o_ref.dtype)


def apply_channel_mask(x, mult):
    """x: (N, C, H, W), mult: (N, C) f32 -> x * mult[..., None, None]."""
    N, C, H, W = x.shape
    rows, cols = N * C, H * W
    itemsize = int(jnp.dtype(x.dtype).itemsize)
    limit = _vmem_limit_bytes()

    xr = x.reshape(rows, cols)
    mr = mult.astype(jnp.float32).reshape(rows, 1)

    # One block <= limit/5: 2 input + 2 output double buffers + mask stay
    # comfortably inside the per-generation scoped-VMEM limit.
    tr, tc = _pick_apply_tiles(rows, cols, itemsize, block_budget=limit // 5)

    out = pl.pallas_call(
        _apply_mask_kernel,
        out_shape=jax.ShapeDtypeStruct((rows, cols), x.dtype),
        grid=(rows // tr, cols // tc),
        in_specs=[
            pl.BlockSpec((tr, 1), lambda i, j: (i, 0)),
            pl.BlockSpec((tr, tc), lambda i, j: (i, j)),
        ],
        out_specs=pl.BlockSpec((tr, tc), lambda i, j: (i, j)),
        compiler_params=pltpu.CompilerParams(
            dimension_semantics=("parallel", "parallel"),
            vmem_limit_bytes=limit),
        cost_estimate=pl.CostEstimate(
            flops=rows * cols,
            transcendentals=0,
            bytes_accessed=2 * rows * cols * itemsize + rows * 4),
    )(mr, xr)
    return out.reshape(N, C, H, W)


# ----------------------------------------------------------------------------
# Full ChannelDrop forward
# ----------------------------------------------------------------------------
def channel_drop_forward(x, key, drop_prob=0.1, training=True, gram_bf16=True):
    """Reproduces ChannelDrop.forward.

    Returns x unchanged when not training or drop_prob == 0 (like PyTorch),
    otherwise returns (out, x_max).  NOTE: `training`/`drop_prob==0` must be
    static Python values — the two branches have different pytree structures,
    exactly as in the PyTorch module.
    """
    assert x.ndim == 4, "Expected input with 4 dimensions (N, C, H, W)"
    if (not training) or drop_prob == 0:
        return x

    N, C, H, W = x.shape
    x_max = ortho_channel_softmax(x, gram_bf16=gram_bf16)         # (N, C)

    k1, k2 = jax.random.split(key)
    # x_mask = 1 - Bernoulli(x_max).sample()
    x_mask = 1.0 - jax.random.bernoulli(k1, x_max).astype(jnp.float32)
    gamma = drop_prob / (jnp.sum(x_mask) / x_mask.size + 1e-12)
    gamma = jnp.clip(gamma, 0.0, 1.0)
    # mask = Bernoulli(gamma).sample((N, C))
    mask = jax.random.bernoulli(k2, gamma, shape=(N, C)).astype(jnp.float32)
    block_mask = 1.0 - x_mask * mask                              # (N, C)
    # guard against the (degenerate) all-dropped case -> avoid inf rescale
    denom = jnp.maximum(jnp.sum(block_mask), 1.0)
    multiplier = block_mask * (block_mask.size / denom)           # (N, C), f32

    out = apply_channel_mask(x, multiplier)
    return out, x_max


# ----------------------------------------------------------------------------
# Pure-JAX reference (correctness check of the Pallas pieces)
# ----------------------------------------------------------------------------
def _ref_ortho_softmax(x):
    N, C, H, W = x.shape
    v = x.reshape(N, C, H * W).astype(jnp.float32)
    v = v / (jnp.sqrt(jnp.sum(v * v, axis=-1, keepdims=True)) + 1e-8)
    P = jnp.abs(jnp.einsum("ncd,nmd->ncm", v, v) - jnp.eye(C)[None])
    rank = jnp.sum(P, axis=-1) / C
    return jax.nn.softmax(rank, axis=-1)


def _run_and_check(x, key, drop_prob, gram_bf16, atol, rtol):
    out, x_max = channel_drop_forward(
        x, key, drop_prob=drop_prob, training=True, gram_bf16=gram_bf16)
    out = jax.block_until_ready(out)
    x_max = jax.block_until_ready(x_max)

    # 1) ortho_channel + softmax vs pure-JAX f32 reference (dtype/mode-aware tol).
    x_max_ref = _ref_ortho_softmax(x)
    if not jnp.allclose(x_max, x_max_ref, atol=atol, rtol=rtol):
        raise SystemExit("x_max mismatch vs reference")

    # 2) masked/rescaled output: reproduce the same RNG path using the kernel's
    #    x_max so the Bernoulli draws match bit-for-bit, then check the multiply.
    N, C = x_max.shape
    k1, k2 = jax.random.split(key)
    x_mask = 1.0 - jax.random.bernoulli(k1, x_max).astype(jnp.float32)
    gamma = jnp.clip(drop_prob / (jnp.sum(x_mask) / x_mask.size + 1e-12), 0.0, 1.0)
    mask = jax.random.bernoulli(k2, gamma, shape=(N, C)).astype(jnp.float32)
    block_mask = 1.0 - x_mask * mask
    denom = jnp.maximum(jnp.sum(block_mask), 1.0)
    mult_ref = block_mask * (block_mask.size / denom)
    out_ref = x * mult_ref[:, :, None, None]
    if not jnp.allclose(out, out_ref, atol=1e-5, rtol=1e-5):
        raise SystemExit("output mismatch vs reference")


if __name__ == "__main__":
    key = jax.random.PRNGKey(0)
    kx, kdrop, kx2, kdrop2 = jax.random.split(key, 4)
    drop_prob = 0.1

    x = jax.random.normal(kx, (2, 4, 16, 16), dtype=jnp.float32)
    # bf16 MXU-operand Gram path (default for f32 inputs): dtype-aware tolerance.
    _run_and_check(x, kdrop, drop_prob, gram_bf16=True, atol=2e-3, rtol=1e-2)
    # exact-operand Gram path: tight tolerance.
    _run_and_check(x, kdrop, drop_prob, gram_bf16=False, atol=1e-5, rtol=1e-5)

    # Non-128-multiple spatial size: exercises kernel 1's lane-padding path and
    # kernel 2's full-extent column fallback.
    x2 = jax.random.normal(kx2, (2, 4, 7, 7), dtype=jnp.float32)
    _run_and_check(x2, kdrop2, drop_prob, gram_bf16=True, atol=2e-3, rtol=1e-2)

    print("KERNEL_OK")
</pallas_src>

<mosaic_0001>
module attributes {stable_mosaic.version = 11 : i64} {
  func.func @_rank_softmax_kernel(%arg0: i32, %arg1: i32, %arg2: memref<1x4x256xf32, #tpu.memory_space<vmem>>, %arg3: memref<1x1x4xf32, #tpu.memory_space<vmem>>, %arg4: memref<4x4xf32, #tpu.memory_space<vmem>>) attributes {dimension_semantics = [#tpu.dimension_semantics<parallel>, #tpu.dimension_semantics<arbitrary>], iteration_bounds = array<i64: 2, 1>, scalar_prefetch = 0 : i64, scratch_operands = 1 : i64, tpu.core_type = #tpu.core_type<tc>, window_params = [{transform_indices = @transform_0, window_bounds = array<i64: 1, 4, 256>}, {transform_indices = @transform_1, window_bounds = array<i64: 1, 1, 4>}]} {
    %c0_i32 = arith.constant 0 : i32
    %0 = arith.cmpi eq, %arg1, %c0_i32 : i32
    %1 = arith.extui %0 : i1 to i32
    %c0_i32_0 = arith.constant 0 : i32
    %2 = arith.cmpi ne, %1, %c0_i32_0 : i32
    scf.if %2 {
      %cst_9 = arith.constant 0.000000e+00 : f32
      %13 = vector.broadcast %cst_9 : f32 to vector<4x4xf32>
      %c0_10 = arith.constant 0 : index
      %c0_11 = arith.constant 0 : index
      %14 = vector.load %arg4[%c0_10, %c0_11] : memref<4x4xf32, #tpu.memory_space<vmem>>, vector<4x4xf32>
      tpu.vector_store %arg4[%c0_10, %c0_11], %13 {strides = array<i32>} : memref<4x4xf32, #tpu.memory_space<vmem>>, vector<4x4xf32>,
    } else {
    }
    %c0 = arith.constant 0 : index
    %c0_1 = arith.constant 0 : index
    %c0_2 = arith.constant 0 : index
    %3 = vector.load %arg2[%c0, %c0_1, %c0_2] : memref<1x4x256xf32, #tpu.memory_space<vmem>>, vector<1x4x256xf32>
    %4 = vector.shape_cast %3 : vector<1x4x256xf32> to vector<4x256xf32>
    %5 = arith.truncf %4 : vector<4x256xf32> to vector<4x256xbf16>
    %c0_3 = arith.constant 0 : index
    %c0_4 = arith.constant 0 : index
    %6 = vector.load %arg4[%c0_3, %c0_4] : memref<4x4xf32, #tpu.memory_space<vmem>>, vector<4x4xf32>
    %cst = arith.constant dense<0.000000e+00> : vector<4x4xf32>
    %7 = tpu.matmul %5, %5, %cst {dimension_numbers = #tpu.dot_dimension_numbers<[1], [1], [0], [0], [0, 0, 1, 0], [], []>} : vector<4x256xbf16>, vector<4x256xbf16>, vector<4x4xf32> -> vector<4x4xf32>
    %8 = arith.addf %6, %7 : vector<4x4xf32>
    %c0_5 = arith.constant 0 : index
    %c0_6 = arith.constant 0 : index
    %9 = vector.load %arg4[%c0_5, %c0_6] : memref<4x4xf32, #tpu.memory_space<vmem>>, vector<4x4xf32>
    tpu.vector_store %arg4[%c0_5, %c0_6], %8 {strides = array<i32>} : memref<4x4xf32, #tpu.memory_space<vmem>>, vector<4x4xf32>,
    %c0_i32_7 = arith.constant 0 : i32
    %10 = arith.cmpi eq, %arg1, %c0_i32_7 : i32
    %11 = arith.extui %10 : i1 to i32
    %c0_i32_8 = arith.constant 0 : i32
    %12 = arith.cmpi ne, %11, %c0_i32_8 : i32
    scf.if %12 {
      %c0_9 = arith.constant 0 : index
      %c0_10 = arith.constant 0 : index
      %13 = vector.load %arg4[%c0_9, %c0_10] : memref<4x4xf32, #tpu.memory_space<vmem>>, vector<4x4xf32>
      %14 = tpu.iota {dimensions = array<i32: 0>} : vector<4x4xi32>
      %15 = tpu.iota {dimensions = array<i32: 1>} : vector<4x4xi32>
      %16 = arith.cmpi eq, %14, %15 : vector<4x4xi32>
      %17 = arith.extui %16 : vector<4x4xi1> to vector<4x4xi32>
      %18 = arith.sitofp %17 : vector<4x4xi32> to vector<4x4xf32>
      %19 = arith.mulf %13, %18 : vector<4x4xf32>
      %cst_11 = arith.constant dense<0.000000e+00> : vector<4xf32>
      %20 = vector.multi_reduction <add>, %19, %cst_11 [1] : vector<4x4xf32> to vector<4xf32>
      %21 = vector.shape_cast %20 : vector<4xf32> to vector<4x1xf32>
      %22 = math.sqrt %21 : vector<4x1xf32>
      %cst_12 = arith.constant 9.99999993E-9 : f32
      %23 = vector.broadcast %cst_12 : f32 to vector<4x1xf32>
      %24 = arith.addf %22, %23 : vector<4x1xf32>
      %cst_13 = arith.constant 1.000000e+00 : f32
      %25 = vector.broadcast %cst_13 : f32 to vector<4x1xf32>
      %26 = arith.divf %25, %24 : vector<4x1xf32>
      %cst_14 = arith.constant dense<0.000000e+00> : vector<4xf32>
      %27 = vector.multi_reduction <add>, %19, %cst_14 [0] : vector<4x4xf32> to vector<4xf32>
      %28 = vector.shape_cast %27 : vector<4xf32> to vector<1x4xf32>
      %29 = math.sqrt %28 : vector<1x4xf32>
      %cst_15 = arith.constant 9.99999993E-9 : f32
      %30 = vector.broadcast %cst_15 : f32 to vector<1x4xf32>
      %31 = arith.addf %29, %30 : vector<1x4xf32>
      %cst_16 = arith.constant 1.000000e+00 : f32
      %32 = vector.broadcast %cst_16 : f32 to vector<1x4xf32>
      %33 = arith.divf %32, %31 : vector<1x4xf32>
      %34 = vector.broadcast %26 : vector<4x1xf32> to vector<4x4xf32>
      %35 = arith.mulf %13, %34 : vector<4x4xf32>
      %36 = vector.broadcast %33 : vector<1x4xf32> to vector<4x4xf32>
      %37 = arith.mulf %35, %36 : vector<4x4xf32>
      %38 = arith.subf %37, %18 : vector<4x4xf32>
      %39 = math.absf %38 : vector<4x4xf32>
      %cst_17 = arith.constant dense<0.000000e+00> : vector<4xf32>
      %40 = vector.multi_reduction <add>, %39, %cst_17 [0] : vector<4x4xf32> to vector<4xf32>
      %41 = vector.shape_cast %40 : vector<4xf32> to vector<1x4xf32>
      %cst_18 = arith.constant 4.000000e+00 : f32
      %42 = vector.broadcast %cst_18 : f32 to vector<1x4xf32>
      %43 = arith.divf %41, %42 : vector<1x4xf32>
      %44 = vector.shape_cast %43 : vector<1x4xf32> to vector<1x1x4xf32>
      %cst_19 = arith.constant dense<0xFF800000> : vector<1xf32>
      %45 = vector.multi_reduction <maximumf>, %44, %cst_19 [1, 2] : vector<1x1x4xf32> to vector<1xf32>
      %46 = vector.shape_cast %45 : vector<1xf32> to vector<1x1x1xf32>
      %47 = vector.extract %46[0, 0, 0] : f32 from vector<1x1x1xf32>
      %48 = vector.broadcast %47 : f32 to vector<1x4xf32>
      %49 = arith.subf %43, %48 : vector<1x4xf32>
      %50 = math.exp %49 : vector<1x4xf32>
      %51 = vector.shape_cast %50 : vector<1x4xf32> to vector<1x1x4xf32>
      %cst_20 = arith.constant dense<0.000000e+00> : vector<1xf32>
      %52 = vector.multi_reduction <add>, %51, %cst_20 [1, 2] : vector<1x1x4xf32> to vector<1xf32>
      %53 = vector.shape_cast %52 : vector<1xf32> to vector<1x1x1xf32>
      %54 = vector.extract %53[0, 0, 0] : f32 from vector<1x1x1xf32>
      %55 = vector.broadcast %54 : f32 to vector<1x4xf32>
      %56 = arith.divf %50, %55 : vector<1x4xf32>
      %c0_21 = arith.constant 0 : index
      %c0_22 = arith.constant 0 : index
      %c0_23 = arith.constant 0 : index
      %57 = vector.load %arg3[%c0_21, %c0_22, %c0_23] : memref<1x1x4xf32, #tpu.memory_space<vmem>>, vector<1x1x4xf32>
      %58 = vector.shape_cast %57 : vector<1x1x4xf32> to vector<1x4xf32>
      %59 = vector.shape_cast %56 : vector<1x4xf32> to vector<1x1x4xf32>
      tpu.vector_store %arg3[%c0_21, %c0_22, %c0_23], %59 {strides = array<i32>} : memref<1x1x4xf32, #tpu.memory_space<vmem>>, vector<1x1x4xf32>,
    } else {
    }
    return
  }
  func.func @transform_0(%arg0: i32, %arg1: i32) -> (i32, i32, i32) {
    %c0_i32 = arith.constant 0 : i32
    %c0_i32_0 = arith.constant 0 : i32
    return %arg0, %c0_i32, %arg1 : i32, i32, i32
  }
  func.func @transform_1(%arg0: i32, %arg1: i32) -> (i32, i32, i32) {
    %c0_i32 = arith.constant 0 : i32
    %c0_i32_0 = arith.constant 0 : i32
    %c0_i32_1 = arith.constant 0 : i32
    return %arg0, %c0_i32, %c0_i32_0 : i32, i32, i32
  }
}

</mosaic_0001>

<llo_original>
// kernel: tpu_custom_call.1
$region0: #{tpu_custom_call.1}
  #allocation0 [shape = 'u32[]', space=smem, size = 0x4, offset = 0x4, fixed_abs, tag = 'smem constant byte address 0x4 - core index']
  #allocation1 [shape = 'u32[144,128]{1,0:T(1,128)}', space=vmem, size = 0x12000, scoped, tag = 'internal scratch']
  #allocation2 [shape = 'f32[4,4]{1,0:T(4,128)}', space=vmem, size = 0x800, scoped, tag = 'scratch operand']
  %s0 = inlined_call_operand.hbm [shape: f32[2,4,256], index: 0, kind: input, shape index: {}]
  %s1 = inlined_call_operand.hbm [shape: f32[2,1,4], index: 1, kind: output, shape index: {}]
  %s2 = sld [smem:[#allocation0]]
  $region49: #{tpu_custom_call.1} parent=0
    _
  %s4 = ssub.s32 1, %s2
  %s5 = scalar_select 0, %s4, %s2
  $region1: #{tpu_custom_call.1} parent=0
    #allocation3 [shape = 'u8[8192]{0}', space=vmem, size = 0x2000, scoped, tag = 'input window, operand 0']
    #allocation4 [shape = 's32[2]{0}', space=sflag, size = 0x8, scoped, tag = 'scoped memory for tpu_custom_call.1']
    #allocation5 [shape = 's32[2]{0}', space=sflag, size = 0x8, scoped, tag = 'scoped memory for tpu_custom_call.1']
    #allocation6 [shape = 'u8[1024]{0}', space=vmem, size = 0x400, scoped, tag = 'output window, operand 0']
    %6 = vsyncpa [#allocation4], 0
    %s7 = scalar_lea.sflag [#allocation4], 1
    %8 = vsyncpa %s7, 0
    %9 = vsyncpa [#allocation5], 0
    %s10 = scalar_lea.sflag [#allocation5], 1
    %11 = vsyncpa %s10, 0
    loop: start=0, step=1, limit=4
    $region2: #{tpu_custom_call.1} parent=1 // loop_pre_header
      _
    $region3: #{tpu_custom_call.1} parent=1 // loop_header
      %s13 = sphi 0, %s17
      %p14 = scmp.ge.s32.totalorder %s13, 4
      %s20 = sphi 0, %s32
      %s21 = sphi 0, %s28
      %s22 = sphi 0, %s20
      %s23 = sphi 0, %s21
      %s24 = sphi 0, %s22
      %s25 = sphi 0, %s23
      %s37 = sphi 0, %s39
      %s40 = sphi 0, %s37
      %s41 = sphi 0, %s40
      %s57 = sphi 0, %s41
      %s63 = sphi 0, %s65
      %s66 = sphi 0, %s63
      %s67 = sphi 0, %s66
      %s83 = sphi 0, %s67
    $region4: #{tpu_custom_call.1} parent=1 // loop_header_branch
      %16 = sbr.rel (%p14) target = $region8
    $region5: #{tpu_custom_call.1} parent=1 // loop_body
      %s18 = ssub.s32 %s13, 1
      %s19 = ssub.s32 %s13, 2
      %s26 = sadd.s32 1, %s21
      %p27 = scmp.ge.s32.totalorder %s26, 1
      %s28 = scalar_select %p27, 0, %s26
      %s29 = sadd.s32 1, %s20
      %s30 = scalar_select %p27, %s29, %s20
      %p31 = scmp.ge.s32.totalorder %s30, 2
      %s32 = scalar_select %p31, 0, %s30
      %s33 = ssub.s32 %s20, %s32
      %s34 = ssub.s32 %s21, %s28
      %s35 = sor.u32 %s33, %s34
      %p36 = scmp.eq.s32.totalorder %s35, 0
      %s38 = sadd.s32 %s37, 1
      %s39 = scalar_select %p36, %s37, %s38
      %p42 = pneg %p36
      %p43 = scmp.eq.s32.totalorder %s13, 1
      %p44 = por %p42, %p43
      %p45 = scmp.ne.s32.totalorder %s37, %s40
      %p46 = scmp.eq.s32.totalorder %s13, 0
      %p47 = por %p45, %p46
      %p48 = scmp.ne.s32.totalorder %s37, %s40
      %p49 = scmp.eq.s32.totalorder %s18, 1
      %p50 = por %p48, %p49
      %p51 = scmp.ne.s32.totalorder %s40, %s41
      %p52 = scmp.eq.s32.totalorder %s18, 0
      %p53 = por %p51, %p52
      %p54 = scmp.ne.s32.totalorder %s40, %s41
      %p55 = scmp.eq.s32.totalorder %s19, 1
      %p56 = por %p54, %p55
      %p58 = scmp.ne.s32.totalorder %s41, %s57
      %p59 = scmp.eq.s32.totalorder %s19, 0
      %p60 = por %p58, %p59
      %s61 = ssub.s32 %s20, %s32
      %p62 = scmp.eq.s32.totalorder %s61, 0
      %s64 = sadd.s32 %s63, 1
      %s65 = scalar_select %p62, %s63, %s64
      %p68 = pneg %p62
      %p69 = scmp.eq.s32.totalorder %s13, 1
      %p70 = por %p68, %p69
      %p71 = scmp.ne.s32.totalorder %s63, %s66
      %p72 = scmp.eq.s32.totalorder %s13, 0
      %p73 = por %p71, %p72
      %p74 = scmp.ne.s32.totalorder %s63, %s66
      %p75 = scmp.eq.s32.totalorder %s18, 1
      %p76 = por %p74, %p75
      %p77 = scmp.ne.s32.totalorder %s66, %s67
      %p78 = scmp.eq.s32.totalorder %s18, 0
      %p79 = por %p77, %p78
      %p80 = scmp.ne.s32.totalorder %s66, %s67
      %p81 = scmp.eq.s32.totalorder %s19, 1
      %p82 = por %p80, %p81
      %p84 = scmp.ne.s32.totalorder %s67, %s83
      %p85 = scmp.eq.s32.totalorder %s19, 0
      %p86 = por %p84, %p85
      %p87 = scmp.le.s32.totalorder 1, %s13
      %p88 = scmp.lt.s32.totalorder %s13, 3
      %p89 = pnand %p87, %p88
      %p90 = pneg %p89
      // Predicated region
      $region9: #{tpu_custom_call.1} parent=5 // pred_check
        _
      $region10: #{tpu_custom_call.1} parent=5 // pred_check_branch
        %92 = sbr.rel (%p89) target = $region12
      $region11: #{tpu_custom_call.1} parent=5 // pred_region
        %s93 = ssub.s32 %s13, 1
      $region12: #{tpu_custom_call.1} parent=5 // pred_fallthru
        _
      %p94 = scmp.lt.s32.totalorder %s13, 2
      // Predicated region
      $region13: #{tpu_custom_call.1} parent=5 // pred_check
        %p95 = pneg %p94
      $region14: #{tpu_custom_call.1} parent=5 // pred_check_branch
        %97 = sbr.rel (%p95) target = $region16
      $region15: #{tpu_custom_call.1} parent=5 // pred_region
        // Predicated region
        $region17: #{tpu_custom_call.1} parent=15 // pred_check
          %p98 = pneg %p47
        $region18: #{tpu_custom_call.1} parent=15 // pred_check_branch
          %100 = sbr.rel (%p98) target = $region20
        $region19: #{tpu_custom_call.1} parent=15 // pred_region
          %s101 = sand.u32 %s37, 1
          %s102 = scalar_lea.sflag [#allocation4], %s101
          %s103 = sand.u32 %s37, 1
          %s104 = smul.addr %s103, 8
          %s105 = scalar_lea.vmem [#allocation3], %s104
          %s106 = smul.u32 2, %s21
          %s108 = ssub.s32 128, 128
          %109 = vsyncadd %s102, %s108
          %s110 = smul.addr %s20, 2
          %s111 = sadd.s32 %s106, %s110
          %s112 = smul.addr %s111, 64
          %s113 = scalar_lea.hbm %s0, %s112
          %s115 = sshll.u32 %s105, 4
          %s116 = int_to_ptr.vmem [resolvable:$true] %s115
          %118 = dma.hbm_to_vmem [thread:$0]  %s113, 128, %s116, %s102
        $region20: #{tpu_custom_call.1} parent=15 // pred_fallthru
          _
      $region16: #{tpu_custom_call.1} parent=5 // pred_fallthru
        _
      %p119 = scmp.le.s32.totalorder 1, %s13
      %p120 = scmp.lt.s32.totalorder %s13, 3
      %p121 = pnand %p119, %p120
      %p122 = pneg %p121
      // Predicated region
      $region21: #{tpu_custom_call.1} parent=5 // pred_check
        _
      $region22: #{tpu_custom_call.1} parent=5 // pred_check_branch
        %124 = sbr.rel (%p121) target = $region24
      $region23: #{tpu_custom_call.1} parent=5 // pred_region
        %s125 = ssub.s32 %s13, 1
        %s126 = sand.u32 %s40, 1
        %s127 = scalar_lea.sflag [#allocation4], %s126
        %s128 = sand.u32 %s40, 1
        %s129 = smul.addr %s128, 8
        %s130 = scalar_lea.vmem [#allocation3], %s129
        // Predicated region
        $region25: #{tpu_custom_call.1} parent=23 // pred_check
          %p131 = pneg %p53
        $region26: #{tpu_custom_call.1} parent=23 // pred_check_branch
          %133 = sbr.rel (%p131) target = $region28
        $region27: #{tpu_custom_call.1} parent=23 // pred_region
          %134 = dma.done %s127, 128
        $region28: #{tpu_custom_call.1} parent=23 // pred_fallthru
          _
        %s135 = sand.u32 %s40, 1
        %s136 = scalar_lea.sflag [#allocation4], %s135
        %s137 = sand.u32 %s40, 1
        %s138 = smul.addr %s137, 8
        %s139 = scalar_lea.vmem [#allocation3], %s138
        %p140 = pneg %p53
        %p141 = pneg %p50
        %p142 = pneg %p79
        %p143 = pneg %p76
        %s144 = sand.u32 %s66, 1
        %s145 = scalar_lea.sflag [#allocation5], %s144
        %s146 = sand.u32 %s66, 1
        %s147 = scalar_lea.vmem [#allocation6], %s146
        %s148 = smul.u32 2, %s23
        %p150 = scmp.eq.s32.totalorder %s23, 0
        // Predicated region
        $region29: #{tpu_custom_call.1} parent=23 // pred_check
          %p151 = pneg %p150
        $region30: #{tpu_custom_call.1} parent=23 // pred_check_branch
          %153 = sbr.rel (%p151) target = $region32
        $region31: #{tpu_custom_call.1} parent=23 // pred_region
          %vm154 = vcmask 27648
          %155 = vst.msk [vmem:[#allocation2] sm:$0xf] %vm154, 0.0
        $region32: #{tpu_custom_call.1} parent=23 // pred_fallthru
          _
        %v156 = vld [vmem:[%s130] sm:$0xff]
        %v158 = vcombine.high %v156, %v156
        %v160 = vpack.c.bf16 %v156, %v156
        %v161 = vpack.c.bf16 %v158, %v158
        %v162 = vld [vmem:[#allocation2] sm:$0xf]
        %163 = vmatprep.subr.bf16.mxu0 %v161
        %164 = vmatpush1.bf16.xpose.msra.mxu0 %v160
        %165 = vmatprep.subr.bf16.mxu0 0
        %166 = vmatpush1.bf16.xpose.msra.mxu0 0
        %167 = vmatprep.subr.bf16.mxu0 0
        %168 = vmatpush1.bf16.xpose.msra.mxu0 0
        %169 = vmatprep.subr.bf16.mxu0 0
        %170 = vmatpush1.bf16.xpose.msra.mxu0 0
        %171 = vmatprep.subr.bf16.mxu0 0
        %172 = vmatpush1.bf16.xpose.msra.mxu0 0
        %173 = vmatprep.subr.bf16.mxu0 0
        %174 = vmatpush1.bf16.xpose.msra.mxu0 0
        %175 = vmatprep.subr.bf16.mxu0 0
        %176 = vmatpush1.bf16.xpose.msra.mxu0 0
        %177 = vmatprep.subr.bf16.mxu0 0
        %178 = vmatpush1.bf16.xpose.msra.mxu0 0
        %179 = vmatprep.subr.bf16.mxu0 0
        %180 = vmatpush1.bf16.xpose.msra.mxu0 0
        %181 = vmatprep.subr.bf16.mxu0 0
        %182 = vmatpush1.bf16.xpose.msra.mxu0 0
        %183 = vmatprep.subr.bf16.mxu0 0
        %184 = vmatpush1.bf16.xpose.msra.mxu0 0
        %185 = vmatprep.subr.bf16.mxu0 0
        %186 = vmatpush1.bf16.xpose.msra.mxu0 0
        %187 = vmatprep.subr.bf16.mxu0 0
        %188 = vmatpush1.bf16.xpose.msra.mxu0 0
        %189 = vmatprep.subr.bf16.mxu0 0
        %190 = vmatpush1.bf16.xpose.msra.mxu0 0
        %191 = vmatprep.subr.bf16.mxu0 0
        %192 = vmatpush1.bf16.xpose.msra.mxu0 0
        %193 = vmatprep.subr.bf16.mxu0 0
        %194 = vmatpush1.bf16.xpose.msra.mxu0 0
        %195 = vmatprep.mubr.bf16.mxu0 %v161
        %196 = vmatmul.mubr.bf16.gmra.mrb[0].mxu0 %v160
        %v197 = vpop.f32.mrb[0].mxu0
        %v198 = vadd.f32 0.0, %v197
        %v199 = vpop.f32.mrb[0].mxu0
        %v200 = vpop.f32.mrb[0].mxu0
        %v201 = vpop.f32.mrb[0].mxu0
        %202 = vdwg.mxu0
        %v203 = vadd.f32 %v162, %v198
        %vm204 = vcmask 27648
        %205 = vst.msk [vmem:[#allocation2] sm:$0xf] %vm204, %v203
        // Predicated region
        $region33: #{tpu_custom_call.1} parent=23 // pred_check
          %p206 = pneg %p150
        $region34: #{tpu_custom_call.1} parent=23 // pred_check_branch
          %208 = sbr.rel (%p206) target = $region36
        $region35: #{tpu_custom_call.1} parent=23 // pred_region
          %v209 = vld [vmem:[#allocation2] sm:$0xf]
          %v210 = vlaneseq
          %v211 = vshrl.u32 %v210, 7
          %v212 = vlaneseq
          %v213 = vand.u32 %v212, 127
          %vm214 = vcmp.eq.s32.totalorder %v211, %v213
          %v215 = vsel %vm214, 1, 0
          %v216 = vcvt.s32.f32 %v215
          %v217 = vmul.f32 %v209, %v216
          %v218 = vsel %vm204, %v217, 0.0
          %219 = vadd.xlane.f32.xlu0 %v218
          %v220 = vpop.xlane.xlu0 %219
          %v221 = vrsqrt.pop %v220
          %v222 = vmul.f32 %v220, %v221
          %vm223 = vcmp.eq.f32.partialorder %v220, inf
          %v224 = vsel %vm223, %v220, %v222
          %vm225 = vcmp.eq.f32.partialorder %v220, 0.0
          %v226 = vand.u32 %v220, 2147483648
          %v227 = vsel %vm225, %v226, %v224
          %v228 = vadd.f32 %v227, 1e-08
          %v229 = vrcp.pop %v228
          %v230 = vmul.f32 1.0, %v229
          %v231 = vrot.slane %v218, 4
          %v232 = vadd.f32 %v218, %v231
          %v233 = vrot.slane %v232, 2
          %v234 = vadd.f32 %v232, %v233
          %v235 = vrot.slane %v234, 1
          %v236 = vadd.f32 %v234, %v235
          %v237 = vrsqrt.pop %v236
          %v238 = vmul.f32 %v236, %v237
          %vm239 = vcmp.eq.f32.partialorder %v236, inf
          %v240 = vsel %vm239, %v236, %v238
          %vm241 = vcmp.eq.f32.partialorder %v236, 0.0
          %v242 = vand.u32 %v236, 2147483648
          %v243 = vsel %vm241, %v242, %v240
          %v244 = vadd.f32 %v243, 1e-08
          %v245 = vrcp.pop %v244
          %v246 = vmul.f32 1.0, %v245
          %v247 = vmul.f32 %v209, %v230
          %v248 = vmul.f32 %v247, %v246
          %v249 = vsub.f32 %v248, %v216
          %v250 = vand.u32 2147483647, %v249
          %v251 = vsel %vm204, %v250, 0.0
          %v252 = vrot.slane %v251, 4
          %v253 = vadd.f32 %v251, %v252
          %v254 = vrot.slane %v253, 2
          %v255 = vadd.f32 %v253, %v254
          %v256 = vrot.slane %v255, 1
          %v257 = vadd.f32 %v255, %v256
          %v258 = vrcp.pop 4.0
          %v259 = vmul.f32 %v257, %v258
          %vm260 = vcmask 31744
          %v261 = vsel %vm260, %v259, -inf
          %262 = vmax.xlane.f32.xlu0 %v261
          %v263 = vpop.xlane.xlu0 %262
          %s264 = vtos %v263
          %v265 = vstv %s264
          %v266 = vsub.f32 %v259, %v265
          %v267 = vmul.f32 %v266, 1.442695
          %v268 = vpow.pop %v267
          %vm269 = vcmask 24576
          %v270 = vsel %vm269, %v268, 0.0
          %271 = vadd.xlane.f32.xlu0 %v270
          %v272 = vpop.xlane.xlu0 %271
          %v273 = vrot.slane %v272, 4
          %v274 = vadd.f32 %v272, %v273
          %v275 = vrot.slane %v274, 2
          %v276 = vadd.f32 %v274, %v275
          %v277 = vrot.slane %v276, 1
          %v278 = vadd.f32 %v276, %v277
          %s279 = vtos %v278
          %v280 = vstv %s279
          %v281 = vrcp.pop %v280
          %v282 = vmul.f32 %v268, %v281
          %283 = vst.msk [vmem:[%s147] sm:$0x1] %vm269, %v282
        $region36: #{tpu_custom_call.1} parent=23 // pred_fallthru
          _
        %s284 = sand.u32 %s66, 1
        %s285 = scalar_lea.sflag [#allocation5], %s284
        %s286 = sand.u32 %s66, 1
        %s287 = scalar_lea.vmem [#allocation6], %s286
        // Predicated region
        $region37: #{tpu_custom_call.1} parent=23 // pred_check
          %p288 = pneg %p76
        $region38: #{tpu_custom_call.1} parent=23 // pred_check_branch
          %290 = sbr.rel (%p288) target = $region40
        $region39: #{tpu_custom_call.1} parent=23 // pred_region
          %s292 = ssub.s32 16, 16
          %293 = vsyncadd %s285, %s292
          %s294 = smul.addr %s22, 16
          %s295 = scalar_lea.hbm %s1, %s294
          %s297 = sshll.u32 %s287, 4
          %s298 = int_to_ptr.vmem [resolvable:$true] %s297
          %300 = dma.vmem_to_hbm [thread:$0]  %s298, 16, %s295, %s285
        $region40: #{tpu_custom_call.1} parent=23 // pred_fallthru
          _
      $region24: #{tpu_custom_call.1} parent=5 // pred_fallthru
        _
      %p301 = scmp.le.s32.totalorder 2, %s13
      // Predicated region
      $region41: #{tpu_custom_call.1} parent=5 // pred_check
        %p302 = pneg %p301
      $region42: #{tpu_custom_call.1} parent=5 // pred_check_branch
        %304 = sbr.rel (%p302) target = $region44
      $region43: #{tpu_custom_call.1} parent=5 // pred_region
        %s305 = ssub.s32 %s13, 2
        // Predicated region
        $region45: #{tpu_custom_call.1} parent=43 // pred_check
          %p306 = pneg %p82
        $region46: #{tpu_custom_call.1} parent=43 // pred_check_branch
          %308 = sbr.rel (%p306) target = $region48
        $region47: #{tpu_custom_call.1} parent=43 // pred_region
          %s309 = sand.u32 %s67, 1
          %s310 = scalar_lea.sflag [#allocation5], %s309
          %s311 = sand.u32 %s67, 1
          %s312 = scalar_lea.vmem [#allocation6], %s311
          %313 = dma.done %s310, 16
        $region48: #{tpu_custom_call.1} parent=43 // pred_fallthru
          _
      $region44: #{tpu_custom_call.1} parent=5 // pred_fallthru
        _
    $region6: #{tpu_custom_call.1} parent=1 // loop_footer
      %s17 = sadd.s32 1, %s13
    $region7: #{tpu_custom_call.1} parent=1 // loop_footer_branch
      %12 = sbr.rel target = $region3
    $region8: #{tpu_custom_call.1} parent=1 // loop_exit
      _
    %314 = vsyncpa [#allocation4], 1
    %s315 = scalar_lea.sflag [#allocation4], 1
    %316 = vsyncpa %s315, 1
    %317 = vsyncpa [#allocation5], 1
    %s318 = scalar_lea.sflag [#allocation5], 1
    %319 = vsyncpa %s318, 1

</llo_original>
